<compile_context>
chip_gen: v6e
topology: v6e:2x2x1
jax: 0.10.0
libtpu: 0.0.40
codegen_flags: <defaults>
</compile_context>

<pallas_src>
import functools
import math
from typing import NamedTuple, Optional

import jax
import jax.numpy as jnp
from jax.experimental import pallas as pl
from jax.experimental.pallas import tpu as pltpu


def _round_up(x, m):
    return ((x + m - 1) // m) * m


@functools.lru_cache(maxsize=None)
def _vmem_capacity_bytes():
    try:
        return int(pltpu.get_tpu_info().vmem_capacity_bytes)
    except Exception:
        return 128 * 1024 * 1024  # v5e / v6e default


def _tile_caps(itemsize):
    """(tm_cap, tn_cap, tk_cap, sublane) for a given compute-dtype itemsize."""
    # v7x-class parts expose 64 MiB VMEM per TensorCore and a ~310 flop/B
    # HBM ratio -> push output tiles to 1024 to cross into compute-bound.
    big = 1024 if _vmem_capacity_bytes() <= 64 * 1024 * 1024 else 512
    tk_cap = 1024 if itemsize >= 4 else 2048
    sublane = {1: 32, 2: 16}.get(itemsize, 8)
    return big, big, tk_cap, sublane


# ----------------------------------------------------------------------------
# Kernels
# ----------------------------------------------------------------------------
def _mixed_linear_bias_kernel(x_ref, w_ref, b_ref, o_ref, acc_ref):
    k = pl.program_id(2)

    # Fold bias into the accumulator init (k == 0); epilogue is just a cast.
    @pl.when(k == 0)
    def _():
        acc_ref[...] = jnp.broadcast_to(
            b_ref[...].astype(jnp.float32), acc_ref.shape)

    acc_ref[...] += jnp.dot(x_ref[...], w_ref[...],
                            preferred_element_type=jnp.float32)

    @pl.when(k == pl.num_programs(2) - 1)
    def _():
        o_ref[...] = acc_ref[...].astype(o_ref.dtype)


def _mixed_linear_nobias_kernel(x_ref, w_ref, o_ref, acc_ref):
    k = pl.program_id(2)

    @pl.when(k == 0)
    def _():
        acc_ref[...] = jnp.zeros_like(acc_ref)

    acc_ref[...] += jnp.dot(x_ref[...], w_ref[...],
                            preferred_element_type=jnp.float32)

    @pl.when(k == pl.num_programs(2) - 1)
    def _():
        o_ref[...] = acc_ref[...].astype(o_ref.dtype)


# ----------------------------------------------------------------------------
# Parameter preparation (pad + cast the weight ONCE, off the hot path)
# ----------------------------------------------------------------------------
class PreparedLinear(NamedTuple):
    weight: jax.Array            # (Kp, Np), compute dtype, tile-padded
    bias: Optional[jax.Array]    # (1, Np) float32, tile-padded; or None
    in_features: int
    out_features: int
    tn: int
    tk: int


def prepare_linear(weight, bias=None, *, compute_dtype=None):
    """Pre-cast / pre-pad the (in_features, out_features) weight and bias."""
    K, N = weight.shape
    if compute_dtype is None:
        # bf16 is MXU-native on v5e/v6e/v7x and halves the HBM weight stream.
        compute_dtype = (jnp.bfloat16 if weight.dtype == jnp.float32
                         else weight.dtype)
    weight = weight.astype(compute_dtype)

    ins = jnp.dtype(compute_dtype).itemsize
    _, tn_cap, tk_cap, _ = _tile_caps(ins)
    tn = min(tn_cap, _round_up(N, 128))
    tk = min(tk_cap, _round_up(K, 128))

    Kp, Np = _round_up(K, tk), _round_up(N, tn)
    if (Kp, Np) != (K, N):
        weight = jnp.pad(weight, ((0, Kp - K), (0, Np - N)))

    bias2d = None
    if bias is not None:
        bias2d = bias.reshape(1, N).astype(jnp.float32)
        if Np != N:
            bias2d = jnp.pad(bias2d, ((0, 0), (0, Np - N)))

    return PreparedLinear(weight, bias2d, K, N, tn, tk)


# ----------------------------------------------------------------------------
# Forward pass
# ----------------------------------------------------------------------------
def mixed_linear(x, weight, bias=None, *, compute_dtype=None, tm=None):
    """y = x @ weight + bias.

    `weight` may be a raw (K, N) array (prepared on the fly) or a
    PreparedLinear from prepare_linear() (preferred: no per-call weight
    padding/casting).  Accumulation is f32; output keeps x's dtype.
    """
    if isinstance(weight, PreparedLinear):
        assert bias is None, "bias is already baked into PreparedLinear"
        params = weight
    else:
        params = prepare_linear(weight, bias, compute_dtype=compute_dtype)

    M, K = x.shape
    assert K == params.in_features, (
        f"in_features mismatch: {K} vs {params.in_features}")
    N = params.out_features

    out_dtype = x.dtype
    compute_dtype = params.weight.dtype
    if x.dtype != compute_dtype:
        x = x.astype(compute_dtype)

    ins = jnp.dtype(compute_dtype).itemsize
    outs = jnp.dtype(out_dtype).itemsize
    tn, tk = params.tn, params.tk
    Kp, Np = params.weight.shape

    tm_cap, _, _, sublane = _tile_caps(ins)
    if tm is None:
        tm = min(tm_cap, _round_up(M, sublane))
    Mp = _round_up(M, tm)
    if (Mp, Kp) != (M, K):
        x = jnp.pad(x, ((0, Mp - M), (0, Kp - K)))

    grid = (Mp // tm, Np // tn, Kp // tk)
    has_bias = params.bias is not None

    in_specs = [
        pl.BlockSpec((tm, tk), lambda i, j, k: (i, k)),   # x tile
        pl.BlockSpec((tk, tn), lambda i, j, k: (k, j)),   # weight tile
    ]
    operands = [x, params.weight]
    if has_bias:
        in_specs.append(pl.BlockSpec((1, tn), lambda i, j, k: (0, j)))
        operands.append(params.bias)
    kernel = _mixed_linear_bias_kernel if has_bias else _mixed_linear_nobias_kernel

    # Real double-buffered VMEM footprint + 25% headroom, clamped so v7x's
    # 64 MiB is never fully requested.
    footprint = (2 * (tm * tk * ins + tk * tn * ins)     # x + weight tiles
                 + (2 * tn * 4 if has_bias else 0)       # bias tile
                 + 2 * tm * tn * outs                    # out tile
                 + tm * tn * 4)                          # f32 accumulator
    vmem_limit = int(min(48 * 1024 * 1024,
                         max(16 * 1024 * 1024, footprint + footprint // 4)))

    # bytes_accessed reflects re-streaming: x read grid_n times, weight grid_m.
    cost = pl.CostEstimate(
        flops=2 * Mp * Np * Kp,
        transcendentals=0,
        bytes_accessed=(grid[1] * Mp * Kp * ins
                        + grid[0] * Kp * Np * ins
                        + (grid[0] * Np * 4 if has_bias else 0)
                        + Mp * Np * outs),
    )

    out = pl.pallas_call(
        kernel,
        out_shape=jax.ShapeDtypeStruct((Mp, Np), out_dtype),
        grid_spec=pltpu.PrefetchScalarGridSpec(
            num_scalar_prefetch=0,
            grid=grid,
            in_specs=in_specs,
            out_specs=pl.BlockSpec((tm, tn), lambda i, j, k: (i, j)),
            scratch_shapes=[pltpu.VMEM((tm, tn), jnp.float32)],
        ),
        compiler_params=pltpu.CompilerParams(
            dimension_semantics=("parallel", "parallel", "arbitrary"),
            vmem_limit_bytes=vmem_limit),
        cost_estimate=cost,
    )(*operands)

    if (Mp, Np) != (M, N):
        out = out[:M, :N]
    return out


def init_params(key, in_features, out_features):
    """Deterministic re-implementation of MixedLinear.reset_parameters."""
    kw, kb = jax.random.split(key)
    # kaiming_uniform_(weight, mode='fan_out', a=sqrt(5)) with weight (in, out):
    # fan_out = out_features; gain = sqrt(2/(1+a^2)) = sqrt(1/3);
    # bound = gain * sqrt(3 / fan_out) = 1 / sqrt(fan_out)
    w_bound = 1.0 / math.sqrt(out_features)
    weight = jax.random.uniform(kw, (in_features, out_features),
                                jnp.float32, -w_bound, w_bound)
    b_bound = 1.0 / math.sqrt(out_features)
    bias = jax.random.uniform(kb, (out_features,), jnp.float32,
                              -b_bound, b_bound)
    return weight, bias


if __name__ == "__main__":
    key = jax.random.PRNGKey(0)
    batch, in_features, out_features = 8, 128, 128
    kx, kp = jax.random.split(key)
    x = jax.random.normal(kx, (batch, in_features), jnp.float32)
    weight, bias = init_params(kp, in_features, out_features)
    y_ref = x @ weight + bias[None, :]

    # --- Case 1: prepared (pre-padded / pre-cast) params, f32 compute: exact.
    params_f32 = prepare_linear(weight, bias, compute_dtype=jnp.float32)
    y = jax.block_until_ready(mixed_linear(x, params_f32))
    assert y.shape == (batch, out_features)
    assert jnp.allclose(y, y_ref, atol=1e-5, rtol=1e-5)

    # --- Case 2: default path = bf16 MXU compute, f32 accumulation / output.
    params_bf16 = prepare_linear(weight, bias)
    y2 = jax.block_until_ready(mixed_linear(x, params_bf16))
    assert y2.shape == (batch, out_features)
    assert y2.dtype == x.dtype
    assert jnp.allclose(y2, y_ref, atol=3e-2, rtol=3e-2)

    # --- Case 3: ragged shapes, no bias, raw-weight convenience path.
    M3, K3, N3 = 5, 100, 70
    kx3, kw3 = jax.random.split(kp)
    x3 = jax.random.normal(kx3, (M3, K3), jnp.float32)
    w3 = jax.random.normal(kw3, (K3, N3), jnp.float32) * 0.1
    y3 = jax.block_until_ready(
        mixed_linear(x3, w3, None, compute_dtype=jnp.float32))
    assert y3.shape == (M3, N3)
    assert jnp.allclose(y3, x3 @ w3, atol=1e-4, rtol=1e-4)

    print("KERNEL_OK")
</pallas_src>

<mosaic_0001>
module attributes {stable_mosaic.version = 11 : i64} {
  func.func @_mixed_linear_bias_kernel(%arg0: i32, %arg1: i32, %arg2: i32, %arg3: memref<8x128xf32, #tpu.memory_space<vmem>>, %arg4: memref<128x128xf32, #tpu.memory_space<vmem>>, %arg5: memref<1x128xf32, #tpu.memory_space<vmem>>, %arg6: memref<8x128xf32, #tpu.memory_space<vmem>>, %arg7: memref<8x128xf32, #tpu.memory_space<vmem>>) attributes {dimension_semantics = [#tpu.dimension_semantics<parallel>, #tpu.dimension_semantics<parallel>, #tpu.dimension_semantics<arbitrary>], iteration_bounds = array<i64: 1, 1, 1>, scalar_prefetch = 0 : i64, scratch_operands = 1 : i64, tpu.core_type = #tpu.core_type<tc>, window_params = [{transform_indices = @transform_0, window_bounds = array<i64: 8, 128>}, {transform_indices = @transform_1, window_bounds = array<i64: 128, 128>}, {transform_indices = @transform_2, window_bounds = array<i64: 1, 128>}, {transform_indices = @transform_3, window_bounds = array<i64: 8, 128>}]} {
    %c0_i32 = arith.constant 0 : i32
    %0 = arith.cmpi eq, %arg2, %c0_i32 : i32
    %1 = arith.extui %0 : i1 to i32
    %c0_i32_0 = arith.constant 0 : i32
    %2 = arith.cmpi ne, %1, %c0_i32_0 : i32
    scf.if %2 {
      %c0_10 = arith.constant 0 : index
      %c0_11 = arith.constant 0 : index
      %12 = vector.load %arg5[%c0_10, %c0_11] : memref<1x128xf32, #tpu.memory_space<vmem>>, vector<1x128xf32>
      %13 = vector.shape_cast %12 : vector<1x128xf32> to vector<1x128xf32>
      %14 = vector.broadcast %13 : vector<1x128xf32> to vector<8x128xf32>
      %c0_12 = arith.constant 0 : index
      %c0_13 = arith.constant 0 : index
      %15 = vector.load %arg7[%c0_12, %c0_13] : memref<8x128xf32, #tpu.memory_space<vmem>>, vector<8x128xf32>
      tpu.vector_store %arg7[%c0_12, %c0_13], %14 {strides = array<i32>} : memref<8x128xf32, #tpu.memory_space<vmem>>, vector<8x128xf32>,
    } else {
    }
    %c0 = arith.constant 0 : index
    %c0_1 = arith.constant 0 : index
    %3 = vector.load %arg7[%c0, %c0_1] : memref<8x128xf32, #tpu.memory_space<vmem>>, vector<8x128xf32>
    %c0_2 = arith.constant 0 : index
    %c0_3 = arith.constant 0 : index
    %4 = vector.load %arg3[%c0_2, %c0_3] : memref<8x128xf32, #tpu.memory_space<vmem>>, vector<8x128xf32>
    %c0_4 = arith.constant 0 : index
    %c0_5 = arith.constant 0 : index
    %5 = vector.load %arg4[%c0_4, %c0_5] : memref<128x128xf32, #tpu.memory_space<vmem>>, vector<128x128xf32>
    %cst = arith.constant dense<0.000000e+00> : vector<8x128xf32>
    %6 = tpu.matmul %4, %5, %cst {dimension_numbers = #tpu.dot_dimension_numbers<[1], [0], [0], [1], [0, 0, 1, 1], [], []>} : vector<8x128xf32>, vector<128x128xf32>, vector<8x128xf32> -> vector<8x128xf32>
    %7 = arith.addf %3, %6 : vector<8x128xf32>
    %c0_6 = arith.constant 0 : index
    %c0_7 = arith.constant 0 : index
    %8 = vector.load %arg7[%c0_6, %c0_7] : memref<8x128xf32, #tpu.memory_space<vmem>>, vector<8x128xf32>
    tpu.vector_store %arg7[%c0_6, %c0_7], %7 {strides = array<i32>} : memref<8x128xf32, #tpu.memory_space<vmem>>, vector<8x128xf32>,
    %c0_i32_8 = arith.constant 0 : i32
    %9 = arith.cmpi eq, %arg2, %c0_i32_8 : i32
    %10 = arith.extui %9 : i1 to i32
    %c0_i32_9 = arith.constant 0 : i32
    %11 = arith.cmpi ne, %10, %c0_i32_9 : i32
    scf.if %11 {
      %c0_10 = arith.constant 0 : index
      %c0_11 = arith.constant 0 : index
      %12 = vector.load %arg7[%c0_10, %c0_11] : memref<8x128xf32, #tpu.memory_space<vmem>>, vector<8x128xf32>
      %c0_12 = arith.constant 0 : index
      %c0_13 = arith.constant 0 : index
      %13 = vector.load %arg6[%c0_12, %c0_13] : memref<8x128xf32, #tpu.memory_space<vmem>>, vector<8x128xf32>
      tpu.vector_store %arg6[%c0_12, %c0_13], %12 {strides = array<i32>} : memref<8x128xf32, #tpu.memory_space<vmem>>, vector<8x128xf32>,
    } else {
    }
    return
  }
  func.func @transform_0(%arg0: i32, %arg1: i32, %arg2: i32) -> (i32, i32) {
    %c0_i32 = arith.constant 0 : i32
    return %arg0, %arg2 : i32, i32
  }
  func.func @transform_1(%arg0: i32, %arg1: i32, %arg2: i32) -> (i32, i32) {
    %c0_i32 = arith.constant 0 : i32
    return %arg2, %arg1 : i32, i32
  }
  func.func @transform_2(%arg0: i32, %arg1: i32, %arg2: i32) -> (i32, i32) {
    %c0_i32 = arith.constant 0 : i32
    %c0_i32_0 = arith.constant 0 : i32
    return %c0_i32, %arg1 : i32, i32
  }
  func.func @transform_3(%arg0: i32, %arg1: i32, %arg2: i32) -> (i32, i32) {
    %c0_i32 = arith.constant 0 : i32
    return %arg0, %arg1 : i32, i32
  }
}

</mosaic_0001>

<llo_original>
// kernel: tpu_custom_call.1
$region0: #{tpu_custom_call.1}
  #allocation0 [shape = 'u32[]', space=smem, size = 0x4, offset = 0x4, fixed_abs, tag = 'smem constant byte address 0x4 - core index']
  #allocation1 [shape = 'u32[144,128]{1,0:T(1,128)}', space=vmem, size = 0x12000, scoped, tag = 'internal scratch']
  #allocation2 [shape = 'f32[8,128]{1,0:T(8,128)}', space=vmem, size = 0x1000, scoped, tag = 'scratch operand']
  %s0 = inlined_call_operand.hbm [shape: f32[8,128], index: 0, kind: input, shape index: {}]
  %s1 = inlined_call_operand.hbm [shape: f32[128,128], index: 1, kind: input, shape index: {}]
  %s2 = inlined_call_operand.vmem [shape: f32[1,128], index: 2, kind: input, shape index: {}]
  %s3 = inlined_call_operand.hbm [shape: f32[8,128], index: 3, kind: output, shape index: {}]
  %s4 = sld [smem:[#allocation0]]
  $region38: #{tpu_custom_call.1} parent=0
    _
  %s6 = ssub.s32 1, %s4
  %s7 = scalar_select 0, %s6, %s4
  $region1: #{tpu_custom_call.1} parent=0
    #allocation3 [shape = 'u8[4096]{0}', space=vmem, size = 0x1000, scoped, tag = 'input window, operand 0, single buffered']
    #allocation4 [shape = 's32[1]{0}', space=sflag, size = 0x4, scoped, tag = 'scoped memory for tpu_custom_call.1']
    #allocation5 [shape = 's32[1]{0}', space=sflag, size = 0x4, scoped, tag = 'scoped memory for tpu_custom_call.1']
    #allocation6 [shape = 'u8[65536]{0}', space=vmem, size = 0x10000, scoped, tag = 'input window, operand 1, single buffered']
    #allocation7 [shape = 's32[1]{0}', space=sflag, size = 0x4, scoped, tag = 'scoped memory for tpu_custom_call.1']
    #allocation8 [shape = 'u8[4096]{0}', space=vmem, size = 0x1000, scoped, tag = 'output window, operand 0, single buffered']
    %8 = vsyncpa [#allocation4], 0
    %9 = vsyncpa [#allocation7], 0
    %10 = vsyncpa [#allocation5], 0
    // Predicated region
    $region2: #{tpu_custom_call.1} parent=1 // pred_check
      _
    $region3: #{tpu_custom_call.1} parent=1 // pred_check_branch
      %12 = sbr.rel (0) target = $region5
    $region4: #{tpu_custom_call.1} parent=1 // pred_region
      %s14 = ssub.s32 128, 128
      %15 = vsyncadd [#allocation4], %s14
      %s17 = sshll.u32 [#allocation3], 4
      %s18 = int_to_ptr.vmem [resolvable:$true] %s17
      %20 = dma.hbm_to_vmem [thread:$0]  %s0, 128, %s18, [#allocation4]
    $region5: #{tpu_custom_call.1} parent=1 // pred_fallthru
      _
    // Predicated region
    $region6: #{tpu_custom_call.1} parent=1 // pred_check
      _
    $region7: #{tpu_custom_call.1} parent=1 // pred_check_branch
      %22 = sbr.rel (0) target = $region9
    $region8: #{tpu_custom_call.1} parent=1 // pred_region
      %s24 = ssub.s32 2048, 2048
      %25 = vsyncadd [#allocation7], %s24
      %s26 = sshll.u32 [#allocation6], 4
      %s27 = int_to_ptr.vmem [resolvable:$true] %s26
      %32 = dma.hbm_to_vmem [thread:$0]  %s1, 2048, %s27, [#allocation7], 128, 128, 8
    $region9: #{tpu_custom_call.1} parent=1 // pred_fallthru
      _
    // Predicated region
    $region10: #{tpu_custom_call.1} parent=1 // pred_check
      _
    $region11: #{tpu_custom_call.1} parent=1 // pred_check_branch
      %34 = sbr.rel (0) target = $region13
    $region12: #{tpu_custom_call.1} parent=1 // pred_region
      _
    $region13: #{tpu_custom_call.1} parent=1 // pred_fallthru
      _
    // Predicated region
    $region14: #{tpu_custom_call.1} parent=1 // pred_check
      _
    $region15: #{tpu_custom_call.1} parent=1 // pred_check_branch
      %36 = sbr.rel (0) target = $region17
    $region16: #{tpu_custom_call.1} parent=1 // pred_region
      %37 = dma.done [#allocation4], 128
    $region17: #{tpu_custom_call.1} parent=1 // pred_fallthru
      _
    // Predicated region
    $region18: #{tpu_custom_call.1} parent=1 // pred_check
      _
    $region19: #{tpu_custom_call.1} parent=1 // pred_check_branch
      %39 = sbr.rel (0) target = $region21
    $region20: #{tpu_custom_call.1} parent=1 // pred_region
      %40 = dma.done [#allocation7], 2048
    $region21: #{tpu_custom_call.1} parent=1 // pred_fallthru
      _
    %p41 = scmp.eq.s32.totalorder 0, 0
    // Predicated region
    $region22: #{tpu_custom_call.1} parent=1 // pred_check
      %p42 = pneg %p41
    $region23: #{tpu_custom_call.1} parent=1 // pred_check_branch
      %44 = sbr.rel (%p42) target = $region25
    $region24: #{tpu_custom_call.1} parent=1 // pred_region
      %v45 = vld [vmem:[%s2] sm:$0x1]
      %v47 = vlaneseq
      %v48 = vshrl.u32 %v47, 7
      %v49 = vsub.s32 0, %v48
      %v50 = vrot.slane %v45, %v49
      %52 = vst [vmem:[#allocation2] sm:$0xff] %v50
    $region25: #{tpu_custom_call.1} parent=1 // pred_fallthru
      _
    %v53 = vld [vmem:[#allocation2] sm:$0xff]
    %v54 = vld [vmem:[#allocation3] sm:$0xff]
    %v55 = vld [vmem:[#allocation6] sm:$0xff]
    %v56 = vld [vmem:[#allocation6 + $0x8] sm:$0xff]
    %v57 = vld [vmem:[#allocation6 + $0x10] sm:$0xff]
    %v58 = vld [vmem:[#allocation6 + $0x18] sm:$0xff]
    %v59 = vld [vmem:[#allocation6 + $0x20] sm:$0xff]
    %v60 = vld [vmem:[#allocation6 + $0x28] sm:$0xff]
    %v61 = vld [vmem:[#allocation6 + $0x30] sm:$0xff]
    %v62 = vld [vmem:[#allocation6 + $0x38] sm:$0xff]
    %v63 = vld [vmem:[#allocation6 + $0x40] sm:$0xff]
    %v64 = vld [vmem:[#allocation6 + $0x48] sm:$0xff]
    %v65 = vld [vmem:[#allocation6 + $0x50] sm:$0xff]
    %v66 = vld [vmem:[#allocation6 + $0x58] sm:$0xff]
    %v67 = vld [vmem:[#allocation6 + $0x60] sm:$0xff]
    %v68 = vld [vmem:[#allocation6 + $0x68] sm:$0xff]
    %v69 = vld [vmem:[#allocation6 + $0x70] sm:$0xff]
    %v70 = vld [vmem:[#allocation6 + $0x78] sm:$0xff]
    %71 = vmatprep.subr.mxu0 0.0
    %72 = vmatpush1.msra.mxu0 %v70
    %73 = vmatprep.subr.mxu0 0.0
    %74 = vmatpush1.msra.mxu0 %v69
    %75 = vmatprep.subr.mxu0 0.0
    %76 = vmatpush1.msra.mxu0 %v68
    %77 = vmatprep.subr.mxu0 0.0
    %78 = vmatpush1.msra.mxu0 %v67
    %79 = vmatprep.subr.mxu0 0.0
    %80 = vmatpush1.msra.mxu0 %v66
    %81 = vmatprep.subr.mxu0 0.0
    %82 = vmatpush1.msra.mxu0 %v65
    %83 = vmatprep.subr.mxu0 0.0
    %84 = vmatpush1.msra.mxu0 %v64
    %85 = vmatprep.subr.mxu0 0.0
    %86 = vmatpush1.msra.mxu0 %v63
    %87 = vmatprep.subr.mxu0 0.0
    %88 = vmatpush1.msra.mxu0 %v62
    %89 = vmatprep.subr.mxu0 0.0
    %90 = vmatpush1.msra.mxu0 %v61
    %91 = vmatprep.subr.mxu0 0.0
    %92 = vmatpush1.msra.mxu0 %v60
    %93 = vmatprep.subr.mxu0 0.0
    %94 = vmatpush1.msra.mxu0 %v59
    %95 = vmatprep.subr.mxu0 0.0
    %96 = vmatpush1.msra.mxu0 %v58
    %97 = vmatprep.subr.mxu0 0.0
    %98 = vmatpush1.msra.mxu0 %v57
    %99 = vmatprep.subr.mxu0 0.0
    %100 = vmatpush1.msra.mxu0 %v56
    %101 = vmatprep.subr.mxu0 0.0
    %102 = vmatpush1.msra.mxu0 %v55
    %103 = vmatprep.subr.mxu0 0.0
    %104 = vmatpush2.msra.mxu0 0.0
    %105 = vmatprep.subr.mxu0 0.0
    %106 = vmatpush2.msra.mxu0 0.0
    %107 = vmatprep.subr.mxu0 0.0
    %108 = vmatpush2.msra.mxu0 0.0
    %109 = vmatprep.subr.mxu0 0.0
    %110 = vmatpush2.msra.mxu0 0.0
    %111 = vmatprep.subr.mxu0 0.0
    %112 = vmatpush2.msra.mxu0 0.0
    %113 = vmatprep.subr.mxu0 0.0
    %114 = vmatpush2.msra.mxu0 0.0
    %115 = vmatprep.subr.mxu0 0.0
    %116 = vmatpush2.msra.mxu0 0.0
    %117 = vmatprep.subr.mxu0 0.0
    %118 = vmatpush2.msra.mxu0 0.0
    %119 = vmatprep.subr.mxu0 0.0
    %120 = vmatpush2.msra.mxu0 0.0
    %121 = vmatprep.subr.mxu0 0.0
    %122 = vmatpush2.msra.mxu0 0.0
    %123 = vmatprep.subr.mxu0 0.0
    %124 = vmatpush2.msra.mxu0 0.0
    %125 = vmatprep.subr.mxu0 0.0
    %126 = vmatpush2.msra.mxu0 0.0
    %127 = vmatprep.subr.mxu0 0.0
    %128 = vmatpush2.msra.mxu0 0.0
    %129 = vmatprep.subr.mxu0 0.0
    %130 = vmatpush2.msra.mxu0 0.0
    %131 = vmatprep.subr.mxu0 0.0
    %132 = vmatpush2.msra.mxu0 0.0
    %133 = vmatprep.subr.mxu0 0.0
    %134 = vmatpush2.msra.mxu0 0.0
    %135 = vmatprep.mubr.f32.mxu0 0.0
    %136 = vmatmul.mubr.f32.gmra.mxu0 %v54
    %v137 = vpop.f32.mrf.mxu0
    %v138 = vadd.f32 0.0, %v137
    %v139 = vpop.f32.mrf.mxu0
    %140 = vdwg.mxu0
    %v141 = vadd.f32 %v53, %v138
    %142 = vst [vmem:[#allocation2] sm:$0xff] %v141
    // Predicated region
    $region26: #{tpu_custom_call.1} parent=1 // pred_check
      %p143 = pneg %p41
    $region27: #{tpu_custom_call.1} parent=1 // pred_check_branch
      %145 = sbr.rel (%p143) target = $region29
    $region28: #{tpu_custom_call.1} parent=1 // pred_region
      %v146 = vld [vmem:[#allocation2] sm:$0xff]
      %147 = vst [vmem:[#allocation8] sm:$0xff] %v146
    $region29: #{tpu_custom_call.1} parent=1 // pred_fallthru
      _
    // Predicated region
    $region30: #{tpu_custom_call.1} parent=1 // pred_check
      _
    $region31: #{tpu_custom_call.1} parent=1 // pred_check_branch
      %149 = sbr.rel (0) target = $region33
    $region32: #{tpu_custom_call.1} parent=1 // pred_region
      %s151 = ssub.s32 128, 128
      %152 = vsyncadd [#allocation5], %s151
      %s154 = sshll.u32 [#allocation8], 4
      %s155 = int_to_ptr.vmem [resolvable:$true] %s154
      %157 = dma.vmem_to_hbm [thread:$0]  %s155, 128, %s3, [#allocation5]
    $region33: #{tpu_custom_call.1} parent=1 // pred_fallthru
      _
    // Predicated region
    $region34: #{tpu_custom_call.1} parent=1 // pred_check
      _
    $region35: #{tpu_custom_call.1} parent=1 // pred_check_branch
      %159 = sbr.rel (0) target = $region37
    $region36: #{tpu_custom_call.1} parent=1 // pred_region
      %160 = dma.done [#allocation5], 128
    $region37: #{tpu_custom_call.1} parent=1 // pred_fallthru
      _
    %161 = vsyncpa [#allocation4], 1
    %162 = vsyncpa [#allocation7], 1
    %163 = vsyncpa [#allocation5], 1

</llo_original>
